<compile_context>
chip_gen: v6e
topology: v6e:2x2x1
jax: 0.10.0
libtpu: 0.0.40
codegen_flags: <defaults>
</compile_context>

<pallas_src>
import functools
import math

import jax
import jax.numpy as jnp
from jax.experimental import pallas as pl
from jax.experimental.pallas import tpu as pltpu


def _round_up(n, m):
    return ((n + m - 1) // m) * m


def _linear_clamp_kernel(x_ref, w_ref, b_ref, o_ref, *, min_value, max_value):
    # x_ref: (TM, K) f32 VMEM tile (pipelined); w_ref: (8, K) f32 VMEM (resident,
    # row-replicated weight); b_ref: (1, 1) f32 SMEM; o_ref: (1, TM) f32 VMEM.
    #
    # y8[r, m] = sum_k w[r, k] * x[m, k]   -- A @ B^T on the MXU, result is a
    # lane-dense row per weight-replica; we keep row 0.
    y8 = jax.lax.dot_general(
        w_ref[...], x_ref[...],
        dimension_numbers=(((1,), (1,)), ((), ())),
        preferred_element_type=jnp.float32,
        precision=jax.lax.Precision.HIGHEST,
    )                                   # (8, TM)
    y = y8[0:1, :] + b_ref[0, 0]        # (1, TM) lane-dense
    y = jnp.maximum(y, min_value)       # clamp_min
    y = jnp.minimum(y, max_value)       # clamp_max
    o_ref[...] = y.astype(o_ref.dtype)


def linear_clamp(x, weight, bias, min_value, max_value, *, tm_max=8192):
    """x: (..., K) f32; weight: (1, K); bias: (1,). Returns (..., 1)."""
    *lead, K = x.shape
    M = math.prod(lead) if lead else 1

    x2d = x.reshape(M, K).astype(jnp.float32)
    # Replicate the (1, K) weight over 8 sublanes -> well-shaped MXU operand.
    w8 = jnp.tile(weight.reshape(1, K).astype(jnp.float32), (8, 1))
    b = bias.reshape(1, 1).astype(jnp.float32)

    # Balanced tiling at lane granularity (128): as-equal-as-possible tiles,
    # never more than one 128-row pad beyond what the grid needs.
    GRAN = 128
    tm_max = max(GRAN, min(int(tm_max), 32768))
    m_ceil = _round_up(M, GRAN)
    num_tiles = pl.cdiv(m_ceil, tm_max)
    TM = _round_up(pl.cdiv(m_ceil, num_tiles), GRAN)
    m_pad = num_tiles * TM
    if m_pad != M:
        x2d = jnp.pad(x2d, ((0, m_pad - M), (0, 0)))

    kernel = functools.partial(
        _linear_clamp_kernel,
        min_value=float(min_value),
        max_value=float(max_value),
    )

    # Scoped-VMEM budget: double-buffered x block (minor dim padded to 128
    # lanes in VMEM) + double-buffered output row + slack.  Explicit so the
    # tile choice is portable across v5e/v6e/v7x scoped-VMEM defaults.
    lanes = max(K, 128)
    vmem_limit = 2 * TM * lanes * 4 + 2 * 8 * TM * 4 + (4 << 20)
    vmem_limit = int(min(max(vmem_limit, 16 << 20), 48 << 20))

    out = pl.pallas_call(
        kernel,
        out_shape=jax.ShapeDtypeStruct((num_tiles, TM), jnp.float32),
        grid_spec=pltpu.PrefetchScalarGridSpec(
            num_scalar_prefetch=0,
            grid=(num_tiles,),
            in_specs=[
                pl.BlockSpec((TM, K), lambda i: (i, 0)),             # x tile (pipelined)
                pl.BlockSpec((8, K), lambda i: (0, 0)),              # weight (tiny, resident)
                pl.BlockSpec(memory_space=pltpu.MemorySpace.SMEM),   # bias scalar
            ],
            out_specs=pl.BlockSpec((1, TM), lambda i: (i, 0)),       # lane-dense row
        ),
        compiler_params=pltpu.CompilerParams(
            dimension_semantics=("parallel",),   # rows independent (megacore on v7x)
            vmem_limit_bytes=vmem_limit,
        ),
    )(x2d, w8, b)

    out = out.reshape(m_pad)[:M]
    return out.reshape(*lead, 1)


if __name__ == "__main__":
    key = jax.random.PRNGKey(0)
    k_x, k_w, k_b = jax.random.split(key, 3)

    # Shapes match the PyTorch spec: x1 = torch.randn(1, 3, 64, 64), Linear(64, 1).
    B, C, H, K = 1, 3, 64, 64
    x = jax.random.normal(k_x, (B, C, H, K), dtype=jnp.float32)

    # Deterministic params (mimics nn.Linear's uniform(-1/sqrt(K), 1/sqrt(K))).
    bound = 1.0 / (K ** 0.5)
    weight = jax.random.uniform(k_w, (1, K), minval=-bound, maxval=bound,
                                dtype=jnp.float32)
    bias = jax.random.uniform(k_b, (1,), minval=-bound, maxval=bound,
                              dtype=jnp.float32)

    min_value, max_value = -0.25, 0.25

    out = linear_clamp(x, weight, bias, min_value, max_value)
    out = jax.block_until_ready(out)

    # Reference in plain JAX (exact f32 element-wise math, no MXU).
    ref = jnp.clip(
        jnp.sum(x * weight.reshape(K), axis=-1, keepdims=True) + bias,
        min_value, max_value)
    assert out.shape == (B, C, H, 1), out.shape
    assert jnp.allclose(out, ref, atol=1e-3, rtol=1e-3), "mismatch vs reference"

    # Also exercise the multi-tile, balanced, pipelined path (grid > 1).
    out_tiled = linear_clamp(x, weight, bias, min_value, max_value, tm_max=128)
    out_tiled = jax.block_until_ready(out_tiled)
    assert jnp.allclose(out_tiled, ref, atol=1e-3, rtol=1e-3), "tiled mismatch"

    print("KERNEL_OK")
</pallas_src>

<mosaic_0001>
module attributes {stable_mosaic.version = 11 : i64} {
  func.func @_linear_clamp_kernel(%arg0: i32, %arg1: memref<256x64xf32, #tpu.memory_space<vmem>>, %arg2: memref<8x64xf32, #tpu.memory_space<vmem>>, %arg3: memref<1x1xf32, #tpu.memory_space<smem>>, %arg4: memref<1x256xf32, #tpu.memory_space<vmem>>) attributes {dimension_semantics = [#tpu.dimension_semantics<parallel>], iteration_bounds = array<i64: 1>, scalar_prefetch = 0 : i64, scratch_operands = 0 : i64, tpu.core_type = #tpu.core_type<tc>, window_params = [{transform_indices = @transform_0, window_bounds = array<i64: 256, 64>}, {pipeline_mode = #tpu.pipeline_mode<synchronous>, transform_indices = @transform_1, window_bounds = array<i64: 8, 64>}, {transform_indices = @transform_2, window_bounds = array<i64: 1, 1>}, {transform_indices = @transform_3, window_bounds = array<i64: 1, 256>}]} {
    %c0 = arith.constant 0 : index
    %c0_0 = arith.constant 0 : index
    %0 = vector.load %arg2[%c0, %c0_0] : memref<8x64xf32, #tpu.memory_space<vmem>>, vector<8x64xf32>
    %c0_1 = arith.constant 0 : index
    %c0_2 = arith.constant 0 : index
    %1 = vector.load %arg1[%c0_1, %c0_2] : memref<256x64xf32, #tpu.memory_space<vmem>>, vector<256x64xf32>
    %cst = arith.constant dense<0.000000e+00> : vector<8x256xf32>
    %2 = tpu.matmul %0, %1, %cst {dimension_numbers = #tpu.dot_dimension_numbers<[1], [1], [0], [0], [0, 0, 1, 0], [], []>, precision = #tpu.contract_precision<fp32>} : vector<8x64xf32>, vector<256x64xf32>, vector<8x256xf32> -> vector<8x256xf32>
    %3 = vector.extract_strided_slice %2 {offsets = [0, 0], sizes = [1, 256], strides = [1, 1]} : vector<8x256xf32> to vector<1x256xf32>
    %c0_3 = arith.constant 0 : index
    %c0_4 = arith.constant 0 : index
    %4 = memref.load %arg3[%c0_3, %c0_4] : memref<1x1xf32, #tpu.memory_space<smem>>
    %5 = vector.broadcast %4 : f32 to vector<1x256xf32>
    %6 = arith.addf %3, %5 : vector<1x256xf32>
    %cst_5 = arith.constant -2.500000e-01 : f32
    %7 = vector.broadcast %cst_5 : f32 to vector<1x256xf32>
    %8 = arith.maximumf %6, %7 : vector<1x256xf32>
    %cst_6 = arith.constant 2.500000e-01 : f32
    %9 = vector.broadcast %cst_6 : f32 to vector<1x256xf32>
    %10 = arith.minimumf %8, %9 : vector<1x256xf32>
    %c0_7 = arith.constant 0 : index
    %c0_8 = arith.constant 0 : index
    %11 = vector.load %arg4[%c0_7, %c0_8] : memref<1x256xf32, #tpu.memory_space<vmem>>, vector<1x256xf32>
    tpu.vector_store %arg4[%c0_7, %c0_8], %10 {strides = array<i32>} : memref<1x256xf32, #tpu.memory_space<vmem>>, vector<1x256xf32>,
    return
  }
  func.func @transform_0(%arg0: i32) -> (i32, i32) {
    %c0_i32 = arith.constant 0 : i32
    %c0_i32_0 = arith.constant 0 : i32
    return %arg0, %c0_i32 : i32, i32
  }
  func.func @transform_1(%arg0: i32) -> (i32, i32) {
    %c0_i32 = arith.constant 0 : i32
    %c0_i32_0 = arith.constant 0 : i32
    %c0_i32_1 = arith.constant 0 : i32
    return %c0_i32, %c0_i32_0 : i32, i32
  }
  func.func @transform_2(%arg0: i32) -> (i32, i32) {
    %c0_i32 = arith.constant 0 : i32
    %c0_i32_0 = arith.constant 0 : i32
    %c0_i32_1 = arith.constant 0 : i32
    return %c0_i32, %c0_i32_0 : i32, i32
  }
  func.func @transform_3(%arg0: i32) -> (i32, i32) {
    %c0_i32 = arith.constant 0 : i32
    %c0_i32_0 = arith.constant 0 : i32
    return %arg0, %c0_i32 : i32, i32
  }
}

</mosaic_0001>

<llo_original>
// kernel: tpu_custom_call.1
$region0: #{tpu_custom_call.1}
  #allocation0 [shape = 'u32[]', space=smem, size = 0x4, offset = 0x4, fixed_abs, tag = 'smem constant byte address 0x4 - core index']
  #allocation1 [shape = 'u32[144,128]{1,0:T(1,128)}', space=vmem, size = 0x12000, scoped, tag = 'internal scratch']
  #allocation2 [shape = 'f32[1,1]{1,0:T(1,128)S(6)}', space=smem, size = 0x200, scoped, tag = 'scoped memory for tpu_custom_call.1']
  %s0 = inlined_call_operand.vmem [shape: f32[256,64], index: 0, kind: input, shape index: {}]
  %s1 = inlined_call_operand.vmem [shape: f32[8,64], index: 1, kind: input, shape index: {}]
  %s2 = inlined_call_operand.<no memory space> [shape: f32[1,1], index: 2, kind: input, shape index: {}]
  %s3 = inlined_call_operand.hbm [shape: f32[1,256], index: 3, kind: output, shape index: {}]
  %s4 = sld [smem:[#allocation0]]
  $region22: #{tpu_custom_call.1} parent=0
    _
  %s6 = ssub.s32 1, %s4
  %s7 = scalar_select 0, %s6, %s4
  %8 = sst [smem:[#allocation2]] %s2
  $region1: #{tpu_custom_call.1} parent=0
    #allocation3 [shape = 'u8[1024]{0}', space=vmem, size = 0x400, scoped, tag = 'output window, operand 0, single buffered']
    #allocation4 [shape = 's32[1]{0}', space=sflag, size = 0x4, scoped, tag = 'scoped memory for tpu_custom_call.1']
    %9 = vsyncpa [#allocation4], 0
    // Predicated region
    $region2: #{tpu_custom_call.1} parent=1 // pred_check
      _
    $region3: #{tpu_custom_call.1} parent=1 // pred_check_branch
      %11 = sbr.rel (0) target = $region5
    $region4: #{tpu_custom_call.1} parent=1 // pred_region
      _
    $region5: #{tpu_custom_call.1} parent=1 // pred_fallthru
      _
    // Predicated region
    $region6: #{tpu_custom_call.1} parent=1 // pred_check
      _
    $region7: #{tpu_custom_call.1} parent=1 // pred_check_branch
      %13 = sbr.rel (0) target = $region9
    $region8: #{tpu_custom_call.1} parent=1 // pred_region
      _
    $region9: #{tpu_custom_call.1} parent=1 // pred_fallthru
      _
    // Predicated region
    $region10: #{tpu_custom_call.1} parent=1 // pred_check
      _
    $region11: #{tpu_custom_call.1} parent=1 // pred_check_branch
      %15 = sbr.rel (0) target = $region13
    $region12: #{tpu_custom_call.1} parent=1 // pred_region
      _
    $region13: #{tpu_custom_call.1} parent=1 // pred_fallthru
      _
    %v16 = vld [vmem:[%s1] sm:$0xff]
    %v17 = vld [vmem:[%s0] sm:$0xff]
    %v18 = vld [vmem:[%s0 + $0x8] sm:$0xff]
    %v19 = vld [vmem:[%s0 + $0x10] sm:$0xff]
    %v20 = vld [vmem:[%s0 + $0x18] sm:$0xff]
    %v21 = vld [vmem:[%s0 + $0x20] sm:$0xff]
    %v22 = vld [vmem:[%s0 + $0x28] sm:$0xff]
    %v23 = vld [vmem:[%s0 + $0x30] sm:$0xff]
    %v24 = vld [vmem:[%s0 + $0x38] sm:$0xff]
    %v25 = vld [vmem:[%s0 + $0x40] sm:$0xff]
    %v26 = vld [vmem:[%s0 + $0x48] sm:$0xff]
    %v27 = vld [vmem:[%s0 + $0x50] sm:$0xff]
    %v28 = vld [vmem:[%s0 + $0x58] sm:$0xff]
    %v29 = vld [vmem:[%s0 + $0x60] sm:$0xff]
    %v30 = vld [vmem:[%s0 + $0x68] sm:$0xff]
    %v31 = vld [vmem:[%s0 + $0x70] sm:$0xff]
    %v32 = vld [vmem:[%s0 + $0x78] sm:$0xff]
    %v33 = vld [vmem:[%s0 + $0x80] sm:$0xff]
    %v34 = vld [vmem:[%s0 + $0x88] sm:$0xff]
    %v35 = vld [vmem:[%s0 + $0x90] sm:$0xff]
    %v36 = vld [vmem:[%s0 + $0x98] sm:$0xff]
    %v37 = vld [vmem:[%s0 + $0xa0] sm:$0xff]
    %v38 = vld [vmem:[%s0 + $0xa8] sm:$0xff]
    %v39 = vld [vmem:[%s0 + $0xb0] sm:$0xff]
    %v40 = vld [vmem:[%s0 + $0xb8] sm:$0xff]
    %v41 = vld [vmem:[%s0 + $0xc0] sm:$0xff]
    %v42 = vld [vmem:[%s0 + $0xc8] sm:$0xff]
    %v43 = vld [vmem:[%s0 + $0xd0] sm:$0xff]
    %v44 = vld [vmem:[%s0 + $0xd8] sm:$0xff]
    %v45 = vld [vmem:[%s0 + $0xe0] sm:$0xff]
    %v46 = vld [vmem:[%s0 + $0xe8] sm:$0xff]
    %v47 = vld [vmem:[%s0 + $0xf0] sm:$0xff]
    %v48 = vld [vmem:[%s0 + $0xf8] sm:$0xff]
    %vm49 = vcmask 523264
    %v51 = vsel %vm49, %v16, 0
    %v54 = vsel %vm49, %v17, 0
    %v57 = vsel %vm49, %v18, 0
    %v60 = vsel %vm49, %v19, 0
    %v63 = vsel %vm49, %v20, 0
    %v66 = vsel %vm49, %v21, 0
    %v69 = vsel %vm49, %v22, 0
    %v72 = vsel %vm49, %v23, 0
    %v75 = vsel %vm49, %v24, 0
    %v78 = vsel %vm49, %v25, 0
    %v81 = vsel %vm49, %v26, 0
    %v84 = vsel %vm49, %v27, 0
    %v87 = vsel %vm49, %v28, 0
    %v90 = vsel %vm49, %v29, 0
    %v93 = vsel %vm49, %v30, 0
    %v96 = vsel %vm49, %v31, 0
    %v99 = vsel %vm49, %v32, 0
    %v102 = vsel %vm49, %v33, 0
    %v105 = vsel %vm49, %v34, 0
    %v108 = vsel %vm49, %v35, 0
    %v111 = vsel %vm49, %v36, 0
    %v114 = vsel %vm49, %v37, 0
    %v117 = vsel %vm49, %v38, 0
    %v120 = vsel %vm49, %v39, 0
    %v123 = vsel %vm49, %v40, 0
    %v126 = vsel %vm49, %v41, 0
    %v129 = vsel %vm49, %v42, 0
    %v132 = vsel %vm49, %v43, 0
    %v135 = vsel %vm49, %v44, 0
    %v138 = vsel %vm49, %v45, 0
    %v141 = vsel %vm49, %v46, 0
    %v144 = vsel %vm49, %v47, 0
    %v147 = vsel %vm49, %v48, 0
    %149 = vmatprep.subr.mxu0 0.0
    %v150 = vand.u32 %v99, 4294901760
    %151 = vmatpush1.xpose.msra.mxu0 %v150
    %152 = vmatprep.subr.mxu0 0.0
    %v153 = vand.u32 %v96, 4294901760
    %154 = vmatpush1.xpose.msra.mxu0 %v153
    %155 = vmatprep.subr.mxu0 0.0
    %v156 = vand.u32 %v93, 4294901760
    %157 = vmatpush1.xpose.msra.mxu0 %v156
    %158 = vmatprep.subr.mxu0 0.0
    %v159 = vand.u32 %v90, 4294901760
    %160 = vmatpush1.xpose.msra.mxu0 %v159
    %161 = vmatprep.subr.mxu0 0.0
    %v162 = vand.u32 %v87, 4294901760
    %163 = vmatpush1.xpose.msra.mxu0 %v162
    %164 = vmatprep.subr.mxu0 0.0
    %v165 = vand.u32 %v84, 4294901760
    %166 = vmatpush1.xpose.msra.mxu0 %v165
    %167 = vmatprep.subr.mxu0 0.0
    %v168 = vand.u32 %v81, 4294901760
    %169 = vmatpush1.xpose.msra.mxu0 %v168
    %170 = vmatprep.subr.mxu0 0.0
    %v171 = vand.u32 %v78, 4294901760
    %172 = vmatpush1.xpose.msra.mxu0 %v171
    %173 = vmatprep.subr.mxu0 0.0
    %v174 = vand.u32 %v75, 4294901760
    %175 = vmatpush1.xpose.msra.mxu0 %v174
    %176 = vmatprep.subr.mxu0 0.0
    %v177 = vand.u32 %v72, 4294901760
    %178 = vmatpush1.xpose.msra.mxu0 %v177
    %179 = vmatprep.subr.mxu0 0.0
    %v180 = vand.u32 %v69, 4294901760
    %181 = vmatpush1.xpose.msra.mxu0 %v180
    %182 = vmatprep.subr.mxu0 0.0
    %v183 = vand.u32 %v66, 4294901760
    %184 = vmatpush1.xpose.msra.mxu0 %v183
    %185 = vmatprep.subr.mxu0 0.0
    %v186 = vand.u32 %v63, 4294901760
    %187 = vmatpush1.xpose.msra.mxu0 %v186
    %188 = vmatprep.subr.mxu0 0.0
    %v189 = vand.u32 %v60, 4294901760
    %190 = vmatpush1.xpose.msra.mxu0 %v189
    %191 = vmatprep.subr.mxu0 0.0
    %v192 = vand.u32 %v57, 4294901760
    %193 = vmatpush1.xpose.msra.mxu0 %v192
    %194 = vmatprep.subr.mxu0 0.0
    %v195 = vand.u32 %v54, 4294901760
    %196 = vmatpush1.xpose.msra.mxu0 %v195
    %197 = vmatprep.subr.mxu0 0.0
    %v198 = vand.u32 %v147, 4294901760
    %199 = vmatpush2.xpose.msra.mxu0 %v198
    %200 = vmatprep.subr.mxu0 0.0
    %v201 = vand.u32 %v144, 4294901760
    %202 = vmatpush2.xpose.msra.mxu0 %v201
    %203 = vmatprep.subr.mxu0 0.0
    %v204 = vand.u32 %v141, 4294901760
    %205 = vmatpush2.xpose.msra.mxu0 %v204
    %206 = vmatprep.subr.mxu0 0.0
    %v207 = vand.u32 %v138, 4294901760
    %208 = vmatpush2.xpose.msra.mxu0 %v207
    %209 = vmatprep.subr.mxu0 0.0
    %v210 = vand.u32 %v135, 4294901760
    %211 = vmatpush2.xpose.msra.mxu0 %v210
    %212 = vmatprep.subr.mxu0 0.0
    %v213 = vand.u32 %v132, 4294901760
    %214 = vmatpush2.xpose.msra.mxu0 %v213
    %215 = vmatprep.subr.mxu0 0.0
    %v216 = vand.u32 %v129, 4294901760
    %217 = vmatpush2.xpose.msra.mxu0 %v216
    %218 = vmatprep.subr.mxu0 0.0
    %v219 = vand.u32 %v126, 4294901760
    %220 = vmatpush2.xpose.msra.mxu0 %v219
    %221 = vmatprep.subr.mxu0 0.0
    %v222 = vand.u32 %v123, 4294901760
    %223 = vmatpush2.xpose.msra.mxu0 %v222
    %224 = vmatprep.subr.mxu0 0.0
    %v225 = vand.u32 %v120, 4294901760
    %226 = vmatpush2.xpose.msra.mxu0 %v225
    %227 = vmatprep.subr.mxu0 0.0
    %v228 = vand.u32 %v117, 4294901760
    %229 = vmatpush2.xpose.msra.mxu0 %v228
    %230 = vmatprep.subr.mxu0 0.0
    %v231 = vand.u32 %v114, 4294901760
    %232 = vmatpush2.xpose.msra.mxu0 %v231
    %233 = vmatprep.subr.mxu0 0.0
    %v234 = vand.u32 %v111, 4294901760
    %235 = vmatpush2.xpose.msra.mxu0 %v234
    %236 = vmatprep.subr.mxu0 0.0
    %v237 = vand.u32 %v108, 4294901760
    %238 = vmatpush2.xpose.msra.mxu0 %v237
    %239 = vmatprep.subr.mxu0 0.0
    %v240 = vand.u32 %v105, 4294901760
    %241 = vmatpush2.xpose.msra.mxu0 %v240
    %242 = vmatprep.subr.mxu0 0.0
    %v243 = vand.u32 %v102, 4294901760
    %244 = vmatpush2.xpose.msra.mxu0 %v243
    %245 = vmatprep.mubr.f32.mxu0 0.0
    %v246 = vand.u32 %v51, 4294901760
    %v247 = vsub.f32 %v51, %v246
    %v248 = vand.u32 %v247, 4294901760
    %v249 = vsub.f32 %v247, %v248
    %v250 = vand.u32 %v249, 4294901760
    %251 = vmatmul.mubr.f32.gmra.mxu0 %v250
    %v252 = vpop.f32.mrf.mxu0
    %v253 = vadd.f32 0.0, %v252
    %v254 = vpop.f32.mrf.mxu0
    %v255 = vadd.f32 0.0, %v254
    %256 = vdwg.mxu0
    %257 = vmatprep.subr.mxu0 0.0
    %v258 = vand.u32 %v99, 4294901760
    %v259 = vsub.f32 %v99, %v258
    %v260 = vand.u32 %v259, 4294901760
    %v261 = vsub.f32 %v259, %v260
    %v262 = vand.u32 %v261, 4294901760
    %263 = vmatpush1.xpose.msra.mxu0 %v262
    %264 = vmatprep.subr.mxu0 0.0
    %v265 = vand.u32 %v96, 4294901760
    %v266 = vsub.f32 %v96, %v265
    %v267 = vand.u32 %v266, 4294901760
    %v268 = vsub.f32 %v266, %v267
    %v269 = vand.u32 %v268, 4294901760
    %270 = vmatpush1.xpose.msra.mxu0 %v269
    %271 = vmatprep.subr.mxu0 0.0
    %v272 = vand.u32 %v93, 4294901760
    %v273 = vsub.f32 %v93, %v272
    %v274 = vand.u32 %v273, 4294901760
    %v275 = vsub.f32 %v273, %v274
    %v276 = vand.u32 %v275, 4294901760
    %277 = vmatpush1.xpose.msra.mxu0 %v276
    %278 = vmatprep.subr.mxu0 0.0
    %v279 = vand.u32 %v90, 4294901760
    %v280 = vsub.f32 %v90, %v279
    %v281 = vand.u32 %v280, 4294901760
    %v282 = vsub.f32 %v280, %v281
    %v283 = vand.u32 %v282, 4294901760
    %284 = vmatpush1.xpose.msra.mxu0 %v283
    %285 = vmatprep.subr.mxu0 0.0
    %v286 = vand.u32 %v87, 4294901760
    %v287 = vsub.f32 %v87, %v286
    %v288 = vand.u32 %v287, 4294901760
    %v289 = vsub.f32 %v287, %v288
    %v290 = vand.u32 %v289, 4294901760
    %291 = vmatpush1.xpose.msra.mxu0 %v290
    %292 = vmatprep.subr.mxu0 0.0
    %v293 = vand.u32 %v84, 4294901760
    %v294 = vsub.f32 %v84, %v293
    %v295 = vand.u32 %v294, 4294901760
    %v296 = vsub.f32 %v294, %v295
    %v297 = vand.u32 %v296, 4294901760
    %298 = vmatpush1.xpose.msra.mxu0 %v297
    %299 = vmatprep.subr.mxu0 0.0
    %v300 = vand.u32 %v81, 4294901760
    %v301 = vsub.f32 %v81, %v300
    %v302 = vand.u32 %v301, 4294901760
    %v303 = vsub.f32 %v301, %v302
    %v304 = vand.u32 %v303, 4294901760
    %305 = vmatpush1.xpose.msra.mxu0 %v304
    %306 = vmatprep.subr.mxu0 0.0
    %v307 = vand.u32 %v78, 4294901760
    %v308 = vsub.f32 %v78, %v307
    %v309 = vand.u32 %v308, 4294901760
    %v310 = vsub.f32 %v308, %v309
    %v311 = vand.u32 %v310, 4294901760
    %312 = vmatpush1.xpose.msra.mxu0 %v311
    %313 = vmatprep.subr.mxu0 0.0
    %v314 = vand.u32 %v75, 4294901760
    %v315 = vsub.f32 %v75, %v314
    %v316 = vand.u32 %v315, 4294901760
    %v317 = vsub.f32 %v315, %v316
    %v318 = vand.u32 %v317, 4294901760
    %319 = vmatpush1.xpose.msra.mxu0 %v318
    %320 = vmatprep.subr.mxu0 0.0
    %v321 = vand.u32 %v72, 4294901760
    %v322 = vsub.f32 %v72, %v321
    %v323 = vand.u32 %v322, 4294901760
    %v324 = vsub.f32 %v322, %v323
    %v325 = vand.u32 %v324, 4294901760
    %326 = vmatpush1.xpose.msra.mxu0 %v325
    %327 = vmatprep.subr.mxu0 0.0
    %v328 = vand.u32 %v69, 4294901760
    %v329 = vsub.f32 %v69, %v328
    %v330 = vand.u32 %v329, 4294901760
    %v331 = vsub.f32 %v329, %v330
    %v332 = vand.u32 %v331, 4294901760
    %333 = vmatpush1.xpose.msra.mxu0 %v332
    %334 = vmatprep.subr.mxu0 0.0
    %v335 = vand.u32 %v66, 4294901760
    %v336 = vsub.f32 %v66, %v335
    %v337 = vand.u32 %v336, 4294901760
    %v338 = vsub.f32 %v336, %v337
    %v339 = vand.u32 %v338, 4294901760
    %340 = vmatpush1.xpose.msra.mxu0 %v339
    %341 = vmatprep.subr.mxu0 0.0
    %v342 = vand.u32 %v63, 4294901760
    %v343 = vsub.f32 %v63, %v342
    %v344 = vand.u32 %v343, 4294901760
    %v345 = vsub.f32 %v343, %v344
    %v346 = vand.u32 %v345, 4294901760
    %347 = vmatpush1.xpose.msra.mxu0 %v346
    %348 = vmatprep.subr.mxu0 0.0
    %v349 = vand.u32 %v60, 4294901760
    %v350 = vsub.f32 %v60, %v349
    %v351 = vand.u32 %v350, 4294901760
    %v352 = vsub.f32 %v350, %v351
    %v353 = vand.u32 %v352, 4294901760
    %354 = vmatpush1.xpose.msra.mxu0 %v353
    %355 = vmatprep.subr.mxu0 0.0
    %v356 = vand.u32 %v57, 4294901760
    %v357 = vsub.f32 %v57, %v356
    %v358 = vand.u32 %v357, 4294901760
    %v359 = vsub.f32 %v357, %v358
    %v360 = vand.u32 %v359, 4294901760
    %361 = vmatpush1.xpose.msra.mxu0 %v360
    %362 = vmatprep.subr.mxu0 0.0
    %v363 = vand.u32 %v54, 4294901760
    %v364 = vsub.f32 %v54, %v363
    %v365 = vand.u32 %v364, 4294901760
    %v366 = vsub.f32 %v364, %v365
    %v367 = vand.u32 %v366, 4294901760
    %368 = vmatpush1.xpose.msra.mxu0 %v367
    %369 = vmatprep.subr.mxu0 0.0
    %v370 = vand.u32 %v147, 4294901760
    %v371 = vsub.f32 %v147, %v370
    %v372 = vand.u32 %v371, 4294901760
    %v373 = vsub.f32 %v371, %v372
    %v374 = vand.u32 %v373, 4294901760
    %375 = vmatpush2.xpose.msra.mxu0 %v374
    %376 = vmatprep.subr.mxu0 0.0
    %v377 = vand.u32 %v144, 4294901760
    %v378 = vsub.f32 %v144, %v377
    %v379 = vand.u32 %v378, 4294901760
    %v380 = vsub.f32 %v378, %v379
    %v381 = vand.u32 %v380, 4294901760
    %382 = vmatpush2.xpose.msra.mxu0 %v381
    %383 = vmatprep.subr.mxu0 0.0
    %v384 = vand.u32 %v141, 4294901760
    %v385 = vsub.f32 %v141, %v384
    %v386 = vand.u32 %v385, 4294901760
    %v387 = vsub.f32 %v385, %v386
    %v388 = vand.u32 %v387, 4294901760
    %389 = vmatpush2.xpose.msra.mxu0 %v388
    %390 = vmatprep.subr.mxu0 0.0
    %v391 = vand.u32 %v138, 4294901760
    %v392 = vsub.f32 %v138, %v391
    %v393 = vand.u32 %v392, 4294901760
    %v394 = vsub.f32 %v392, %v393
    %v395 = vand.u32 %v394, 4294901760
    %396 = vmatpush2.xpose.msra.mxu0 %v395
    %397 = vmatprep.subr.mxu0 0.0
    %v398 = vand.u32 %v135, 4294901760
    %v399 = vsub.f32 %v135, %v398
    %v400 = vand.u32 %v399, 4294901760
    %v401 = vsub.f32 %v399, %v400
    %v402 = vand.u32 %v401, 4294901760
    %403 = vmatpush2.xpose.msra.mxu0 %v402
    %404 = vmatprep.subr.mxu0 0.0
    %v405 = vand.u32 %v132, 4294901760
    %v406 = vsub.f32 %v132, %v405
    %v407 = vand.u32 %v406, 4294901760
    %v408 = vsub.f32 %v406, %v407
    %v409 = vand.u32 %v408, 4294901760
    %410 = vmatpush2.xpose.msra.mxu0 %v409
    %411 = vmatprep.subr.mxu0 0.0
    %v412 = vand.u32 %v129, 4294901760
    %v413 = vsub.f32 %v129, %v412
    %v414 = vand.u32 %v413, 4294901760
    %v415 = vsub.f32 %v413, %v414
    %v416 = vand.u32 %v415, 4294901760
    %417 = vmatpush2.xpose.msra.mxu0 %v416
    %418 = vmatprep.subr.mxu0 0.0
    %v419 = vand.u32 %v126, 4294901760
    %v420 = vsub.f32 %v126, %v419
    %v421 = vand.u32 %v420, 4294901760
    %v422 = vsub.f32 %v420, %v421
    %v423 = vand.u32 %v422, 4294901760
    %424 = vmatpush2.xpose.msra.mxu0 %v423
    %425 = vmatprep.subr.mxu0 0.0
    %v426 = vand.u32 %v123, 4294901760
    %v427 = vsub.f32 %v123, %v426
    %v428 = vand.u32 %v427, 4294901760
    %v429 = vsub.f32 %v427, %v428
    %v430 = vand.u32 %v429, 4294901760
    %431 = vmatpush2.xpose.msra.mxu0 %v430
    %432 = vmatprep.subr.mxu0 0.0
    %v433 = vand.u32 %v120, 4294901760
    %v434 = vsub.f32 %v120, %v433
    %v435 = vand.u32 %v434, 4294901760
    %v436 = vsub.f32 %v434, %v435
    %v437 = vand.u32 %v436, 4294901760
    %438 = vmatpush2.xpose.msra.mxu0 %v437
    %439 = vmatprep.subr.mxu0 0.0
    %v440 = vand.u32 %v117, 4294901760
    %v441 = vsub.f32 %v117, %v440
    %v442 = vand.u32 %v441, 4294901760
    %v443 = vsub.f32 %v441, %v442
    %v444 = vand.u32 %v443, 4294901760
    %445 = vmatpush2.xpose.msra.mxu0 %v444
    %446 = vmatprep.subr.mxu0 0.0
    %v447 = vand.u32 %v114, 4294901760
    %v448 = vsub.f32 %v114, %v447
    %v449 = vand.u32 %v448, 4294901760
    %v450 = vsub.f32 %v448, %v449
    %v451 = vand.u32 %v450, 4294901760
    %452 = vmatpush2.xpose.msra.mxu0 %v451
    %453 = vmatprep.subr.mxu0 0.0
    %v454 = vand.u32 %v111, 4294901760
    %v455 = vsub.f32 %v111, %v454
    %v456 = vand.u32 %v455, 4294901760
    %v457 = vsub.f32 %v455, %v456
    %v458 = vand.u32 %v457, 4294901760
    %459 = vmatpush2.xpose.msra.mxu0 %v458
    %460 = vmatprep.subr.mxu0 0.0
    %v461 = vand.u32 %v108, 4294901760
    %v462 = vsub.f32 %v108, %v461
    %v463 = vand.u32 %v462, 4294901760
    %v464 = vsub.f32 %v462, %v463
    %v465 = vand.u32 %v464, 4294901760
    %466 = vmatpush2.xpose.msra.mxu0 %v465
    %467 = vmatprep.subr.mxu0 0.0
    %v468 = vand.u32 %v105, 4294901760
    %v469 = vsub.f32 %v105, %v468
    %v470 = vand.u32 %v469, 4294901760
    %v471 = vsub.f32 %v469, %v470
    %v472 = vand.u32 %v471, 4294901760
    %473 = vmatpush2.xpose.msra.mxu0 %v472
    %474 = vmatprep.subr.mxu0 0.0
    %v475 = vand.u32 %v102, 4294901760
    %v476 = vsub.f32 %v102, %v475
    %v477 = vand.u32 %v476, 4294901760
    %v478 = vsub.f32 %v476, %v477
    %v479 = vand.u32 %v478, 4294901760
    %480 = vmatpush2.xpose.msra.mxu0 %v479
    %481 = vmatprep.mubr.f32.mxu0 0.0
    %v482 = vand.u32 %v51, 4294901760
    %483 = vmatmul.mubr.f32.gmra.mxu0 %v482
    %v484 = vpop.f32.mrf.mxu0
    %v485 = vadd.f32 %v253, %v484
    %v486 = vpop.f32.mrf.mxu0
    %v487 = vadd.f32 %v255, %v486
    %488 = vdwg.mxu0
    %489 = vmatprep.subr.mxu0 0.0
    %v490 = vand.u32 %v99, 4294901760
    %v491 = vsub.f32 %v99, %v490
    %492 = vmatpush1.xpose.msra.mxu0 %v491
    %493 = vmatprep.subr.mxu0 0.0
    %v494 = vand.u32 %v96, 4294901760
    %v495 = vsub.f32 %v96, %v494
    %496 = vmatpush1.xpose.msra.mxu0 %v495
    %497 = vmatprep.subr.mxu0 0.0
    %v498 = vand.u32 %v93, 4294901760
    %v499 = vsub.f32 %v93, %v498
    %500 = vmatpush1.xpose.msra.mxu0 %v499
    %501 = vmatprep.subr.mxu0 0.0
    %v502 = vand.u32 %v90, 4294901760
    %v503 = vsub.f32 %v90, %v502
    %504 = vmatpush1.xpose.msra.mxu0 %v503
    %505 = vmatprep.subr.mxu0 0.0
    %v506 = vand.u32 %v87, 4294901760
    %v507 = vsub.f32 %v87, %v506
    %508 = vmatpush1.xpose.msra.mxu0 %v507
    %509 = vmatprep.subr.mxu0 0.0
    %v510 = vand.u32 %v84, 4294901760
    %v511 = vsub.f32 %v84, %v510
    %512 = vmatpush1.xpose.msra.mxu0 %v511
    %513 = vmatprep.subr.mxu0 0.0
    %v514 = vand.u32 %v81, 4294901760
    %v515 = vsub.f32 %v81, %v514
    %516 = vmatpush1.xpose.msra.mxu0 %v515
    %517 = vmatprep.subr.mxu0 0.0
    %v518 = vand.u32 %v78, 4294901760
    %v519 = vsub.f32 %v78, %v518
    %520 = vmatpush1.xpose.msra.mxu0 %v519
    %521 = vmatprep.subr.mxu0 0.0
    %v522 = vand.u32 %v75, 4294901760
    %v523 = vsub.f32 %v75, %v522
    %524 = vmatpush1.xpose.msra.mxu0 %v523
    %525 = vmatprep.subr.mxu0 0.0
    %v526 = vand.u32 %v72, 4294901760
    %v527 = vsub.f32 %v72, %v526
    %528 = vmatpush1.xpose.msra.mxu0 %v527
    %529 = vmatprep.subr.mxu0 0.0
    %v530 = vand.u32 %v69, 4294901760
    %v531 = vsub.f32 %v69, %v530
    %532 = vmatpush1.xpose.msra.mxu0 %v531
    %533 = vmatprep.subr.mxu0 0.0
    %v534 = vand.u32 %v66, 4294901760
    %v535 = vsub.f32 %v66, %v534
    %536 = vmatpush1.xpose.msra.mxu0 %v535
    %537 = vmatprep.subr.mxu0 0.0
    %v538 = vand.u32 %v63, 4294901760
    %v539 = vsub.f32 %v63, %v538
    %540 = vmatpush1.xpose.msra.mxu0 %v539
    %541 = vmatprep.subr.mxu0 0.0
    %v542 = vand.u32 %v60, 4294901760
    %v543 = vsub.f32 %v60, %v542
    %544 = vmatpush1.xpose.msra.mxu0 %v543
    %545 = vmatprep.subr.mxu0 0.0
    %v546 = vand.u32 %v57, 4294901760
    %v547 = vsub.f32 %v57, %v546
    %548 = vmatpush1.xpose.msra.mxu0 %v547
    %549 = vmatprep.subr.mxu0 0.0
    %v550 = vand.u32 %v54, 4294901760
    %v551 = vsub.f32 %v54, %v550
    %552 = vmatpush1.xpose.msra.mxu0 %v551
    %553 = vmatprep.subr.mxu0 0.0
    %v554 = vand.u32 %v147, 4294901760
    %v555 = vsub.f32 %v147, %v554
    %556 = vmatpush2.xpose.msra.mxu0 %v555
    %557 = vmatprep.subr.mxu0 0.0
    %v558 = vand.u32 %v144, 4294901760
    %v559 = vsub.f32 %v144, %v558
    %560 = vmatpush2.xpose.msra.mxu0 %v559
    %561 = vmatprep.subr.mxu0 0.0
    %v562 = vand.u32 %v141, 4294901760
    %v563 = vsub.f32 %v141, %v562
    %564 = vmatpush2.xpose.msra.mxu0 %v563
    %565 = vmatprep.subr.mxu0 0.0
    %v566 = vand.u32 %v138, 4294901760
    %v567 = vsub.f32 %v138, %v566
    %568 = vmatpush2.xpose.msra.mxu0 %v567
    %569 = vmatprep.subr.mxu0 0.0
    %v570 = vand.u32 %v135, 4294901760
    %v571 = vsub.f32 %v135, %v570
    %572 = vmatpush2.xpose.msra.mxu0 %v571
    %573 = vmatprep.subr.mxu0 0.0
    %v574 = vand.u32 %v132, 4294901760
    %v575 = vsub.f32 %v132, %v574
    %576 = vmatpush2.xpose.msra.mxu0 %v575
    %577 = vmatprep.subr.mxu0 0.0
    %v578 = vand.u32 %v129, 4294901760
    %v579 = vsub.f32 %v129, %v578
    %580 = vmatpush2.xpose.msra.mxu0 %v579
    %581 = vmatprep.subr.mxu0 0.0
    %v582 = vand.u32 %v126, 4294901760
    %v583 = vsub.f32 %v126, %v582
    %584 = vmatpush2.xpose.msra.mxu0 %v583
    %585 = vmatprep.subr.mxu0 0.0
    %v586 = vand.u32 %v123, 4294901760
    %v587 = vsub.f32 %v123, %v586
    %588 = vmatpush2.xpose.msra.mxu0 %v587
    %589 = vmatprep.subr.mxu0 0.0
    %v590 = vand.u32 %v120, 4294901760
    %v591 = vsub.f32 %v120, %v590
    %592 = vmatpush2.xpose.msra.mxu0 %v591
    %593 = vmatprep.subr.mxu0 0.0
    %v594 = vand.u32 %v117, 4294901760
    %v595 = vsub.f32 %v117, %v594
    %596 = vmatpush2.xpose.msra.mxu0 %v595
    %597 = vmatprep.subr.mxu0 0.0
    %v598 = vand.u32 %v114, 4294901760
    %v599 = vsub.f32 %v114, %v598
    %600 = vmatpush2.xpose.msra.mxu0 %v599
    %601 = vmatprep.subr.mxu0 0.0
    %v602 = vand.u32 %v111, 4294901760
    %v603 = vsub.f32 %v111, %v602
    %604 = vmatpush2.xpose.msra.mxu0 %v603
    %605 = vmatprep.subr.mxu0 0.0
    %v606 = vand.u32 %v108, 4294901760
    %v607 = vsub.f32 %v108, %v606
    %608 = vmatpush2.xpose.msra.mxu0 %v607
    %609 = vmatprep.subr.mxu0 0.0
    %v610 = vand.u32 %v105, 4294901760
    %v611 = vsub.f32 %v105, %v610
    %612 = vmatpush2.xpose.msra.mxu0 %v611
    %613 = vmatprep.subr.mxu0 0.0
    %v614 = vand.u32 %v102, 4294901760
    %v615 = vsub.f32 %v102, %v614
    %616 = vmatpush2.xpose.msra.mxu0 %v615
    %617 = vmatprep.mubr.f32.mxu0 0.0
    %v618 = vand.u32 %v51, 4294901760
    %v619 = vsub.f32 %v51, %v618
    %620 = vmatmul.mubr.f32.gmra.mxu0 %v619
    %v621 = vpop.f32.mrf.mxu0
    %v622 = vadd.f32 %v485, %v621
    %v623 = vpop.f32.mrf.mxu0
    %v624 = vadd.f32 %v487, %v623
    %625 = vdwg.mxu0
    %626 = vmatprep.subr.mxu0 0.0
    %v627 = vand.u32 %v99, 4294901760
    %628 = vmatpush1.xpose.msra.mxu0 %v627
    %629 = vmatprep.subr.mxu0 0.0
    %v630 = vand.u32 %v96, 4294901760
    %631 = vmatpush1.xpose.msra.mxu0 %v630
    %632 = vmatprep.subr.mxu0 0.0
    %v633 = vand.u32 %v93, 4294901760
    %634 = vmatpush1.xpose.msra.mxu0 %v633
    %635 = vmatprep.subr.mxu0 0.0
    %v636 = vand.u32 %v90, 4294901760
    %637 = vmatpush1.xpose.msra.mxu0 %v636
    %638 = vmatprep.subr.mxu0 0.0
    %v639 = vand.u32 %v87, 4294901760
    %640 = vmatpush1.xpose.msra.mxu0 %v639
    %641 = vmatprep.subr.mxu0 0.0
    %v642 = vand.u32 %v84, 4294901760
    %643 = vmatpush1.xpose.msra.mxu0 %v642
    %644 = vmatprep.subr.mxu0 0.0
    %v645 = vand.u32 %v81, 4294901760
    %646 = vmatpush1.xpose.msra.mxu0 %v645
    %647 = vmatprep.subr.mxu0 0.0
    %v648 = vand.u32 %v78, 4294901760
    %649 = vmatpush1.xpose.msra.mxu0 %v648
    %650 = vmatprep.subr.mxu0 0.0
    %v651 = vand.u32 %v75, 4294901760
    %652 = vmatpush1.xpose.msra.mxu0 %v651
    %653 = vmatprep.subr.mxu0 0.0
    %v654 = vand.u32 %v72, 4294901760
    %655 = vmatpush1.xpose.msra.mxu0 %v654
    %656 = vmatprep.subr.mxu0 0.0
    %v657 = vand.u32 %v69, 4294901760
    %658 = vmatpush1.xpose.msra.mxu0 %v657
    %659 = vmatprep.subr.mxu0 0.0
    %v660 = vand.u32 %v66, 4294901760
    %661 = vmatpush1.xpose.msra.mxu0 %v660
    %662 = vmatprep.subr.mxu0 0.0
    %v663 = vand.u32 %v63, 4294901760
    %664 = vmatpush1.xpose.msra.mxu0 %v663
    %665 = vmatprep.subr.mxu0 0.0
    %v666 = vand.u32 %v60, 4294901760
    %667 = vmatpush1.xpose.msra.mxu0 %v666
    %668 = vmatprep.subr.mxu0 0.0
    %v669 = vand.u32 %v57, 4294901760
    %670 = vmatpush1.xpose.msra.mxu0 %v669
    %671 = vmatprep.subr.mxu0 0.0
    %v672 = vand.u32 %v54, 4294901760
    %673 = vmatpush1.xpose.msra.mxu0 %v672
    %674 = vmatprep.subr.mxu0 0.0
    %v675 = vand.u32 %v147, 4294901760
    %676 = vmatpush2.xpose.msra.mxu0 %v675
    %677 = vmatprep.subr.mxu0 0.0
    %v678 = vand.u32 %v144, 4294901760
    %679 = vmatpush2.xpose.msra.mxu0 %v678
    %680 = vmatprep.subr.mxu0 0.0
    %v681 = vand.u32 %v141, 4294901760
    %682 = vmatpush2.xpose.msra.mxu0 %v681
    %683 = vmatprep.subr.mxu0 0.0
    %v684 = vand.u32 %v138, 4294901760
    %685 = vmatpush2.xpose.msra.mxu0 %v684
    %686 = vmatprep.subr.mxu0 0.0
    %v687 = vand.u32 %v135, 4294901760
    %688 = vmatpush2.xpose.msra.mxu0 %v687
    %689 = vmatprep.subr.mxu0 0.0
    %v690 = vand.u32 %v132, 4294901760
    %691 = vmatpush2.xpose.msra.mxu0 %v690
    %692 = vmatprep.subr.mxu0 0.0
    %v693 = vand.u32 %v129, 4294901760
    %694 = vmatpush2.xpose.msra.mxu0 %v693
    %695 = vmatprep.subr.mxu0 0.0
    %v696 = vand.u32 %v126, 4294901760
    %697 = vmatpush2.xpose.msra.mxu0 %v696
    %698 = vmatprep.subr.mxu0 0.0
    %v699 = vand.u32 %v123, 4294901760
    %700 = vmatpush2.xpose.msra.mxu0 %v699
    %701 = vmatprep.subr.mxu0 0.0
    %v702 = vand.u32 %v120, 4294901760
    %703 = vmatpush2.xpose.msra.mxu0 %v702
    %704 = vmatprep.subr.mxu0 0.0
    %v705 = vand.u32 %v117, 4294901760
    %706 = vmatpush2.xpose.msra.mxu0 %v705
    %707 = vmatprep.subr.mxu0 0.0
    %v708 = vand.u32 %v114, 4294901760
    %709 = vmatpush2.xpose.msra.mxu0 %v708
    %710 = vmatprep.subr.mxu0 0.0
    %v711 = vand.u32 %v111, 4294901760
    %712 = vmatpush2.xpose.msra.mxu0 %v711
    %713 = vmatprep.subr.mxu0 0.0
    %v714 = vand.u32 %v108, 4294901760
    %715 = vmatpush2.xpose.msra.mxu0 %v714
    %716 = vmatprep.subr.mxu0 0.0
    %v717 = vand.u32 %v105, 4294901760
    %718 = vmatpush2.xpose.msra.mxu0 %v717
    %719 = vmatprep.subr.mxu0 0.0
    %v720 = vand.u32 %v102, 4294901760
    %721 = vmatpush2.xpose.msra.mxu0 %v720
    %722 = vmatprep.mubr.f32.mxu0 0.0
    %v723 = vand.u32 %v51, 4294901760
    %v724 = vsub.f32 %v51, %v723
    %v725 = vand.u32 %v724, 4294901760
    %726 = vmatmul.mubr.f32.gmra.mxu0 %v725
    %v727 = vpop.f32.mrf.mxu0
    %v728 = vadd.f32 %v622, %v727
    %v729 = vpop.f32.mrf.mxu0
    %v730 = vadd.f32 %v624, %v729
    %731 = vdwg.mxu0
    %732 = vmatprep.subr.mxu0 0.0
    %v733 = vand.u32 %v99, 4294901760
    %v734 = vsub.f32 %v99, %v733
    %v735 = vand.u32 %v734, 4294901760
    %736 = vmatpush1.xpose.msra.mxu0 %v735
    %737 = vmatprep.subr.mxu0 0.0
    %v738 = vand.u32 %v96, 4294901760
    %v739 = vsub.f32 %v96, %v738
    %v740 = vand.u32 %v739, 4294901760
    %741 = vmatpush1.xpose.msra.mxu0 %v740
    %742 = vmatprep.subr.mxu0 0.0
    %v743 = vand.u32 %v93, 4294901760
    %v744 = vsub.f32 %v93, %v743
    %v745 = vand.u32 %v744, 4294901760
    %746 = vmatpush1.xpose.msra.mxu0 %v745
    %747 = vmatprep.subr.mxu0 0.0
    %v748 = vand.u32 %v90, 4294901760
    %v749 = vsub.f32 %v90, %v748
    %v750 = vand.u32 %v749, 4294901760
    %751 = vmatpush1.xpose.msra.mxu0 %v750
    %752 = vmatprep.subr.mxu0 0.0
    %v753 = vand.u32 %v87, 4294901760
    %v754 = vsub.f32 %v87, %v753
    %v755 = vand.u32 %v754, 4294901760
    %756 = vmatpush1.xpose.msra.mxu0 %v755
    %757 = vmatprep.subr.mxu0 0.0
    %v758 = vand.u32 %v84, 4294901760
    %v759 = vsub.f32 %v84, %v758
    %v760 = vand.u32 %v759, 4294901760
    %761 = vmatpush1.xpose.msra.mxu0 %v760
    %762 = vmatprep.subr.mxu0 0.0
    %v763 = vand.u32 %v81, 4294901760
    %v764 = vsub.f32 %v81, %v763
    %v765 = vand.u32 %v764, 4294901760
    %766 = vmatpush1.xpose.msra.mxu0 %v765
    %767 = vmatprep.subr.mxu0 0.0
    %v768 = vand.u32 %v78, 4294901760
    %v769 = vsub.f32 %v78, %v768
    %v770 = vand.u32 %v769, 4294901760
    %771 = vmatpush1.xpose.msra.mxu0 %v770
    %772 = vmatprep.subr.mxu0 0.0
    %v773 = vand.u32 %v75, 4294901760
    %v774 = vsub.f32 %v75, %v773
    %v775 = vand.u32 %v774, 4294901760
    %776 = vmatpush1.xpose.msra.mxu0 %v775
    %777 = vmatprep.subr.mxu0 0.0
    %v778 = vand.u32 %v72, 4294901760
    %v779 = vsub.f32 %v72, %v778
    %v780 = vand.u32 %v779, 4294901760
    %781 = vmatpush1.xpose.msra.mxu0 %v780
    %782 = vmatprep.subr.mxu0 0.0
    %v783 = vand.u32 %v69, 4294901760
    %v784 = vsub.f32 %v69, %v783
    %v785 = vand.u32 %v784, 4294901760
    %786 = vmatpush1.xpose.msra.mxu0 %v785
    %787 = vmatprep.subr.mxu0 0.0
    %v788 = vand.u32 %v66, 4294901760
    %v789 = vsub.f32 %v66, %v788
    %v790 = vand.u32 %v789, 4294901760
    %791 = vmatpush1.xpose.msra.mxu0 %v790
    %792 = vmatprep.subr.mxu0 0.0
    %v793 = vand.u32 %v63, 4294901760
    %v794 = vsub.f32 %v63, %v793
    %v795 = vand.u32 %v794, 4294901760
    %796 = vmatpush1.xpose.msra.mxu0 %v795
    %797 = vmatprep.subr.mxu0 0.0
    %v798 = vand.u32 %v60, 4294901760
    %v799 = vsub.f32 %v60, %v798
    %v800 = vand.u32 %v799, 4294901760
    %801 = vmatpush1.xpose.msra.mxu0 %v800
    %802 = vmatprep.subr.mxu0 0.0
    %v803 = vand.u32 %v57, 4294901760
    %v804 = vsub.f32 %v57, %v803
    %v805 = vand.u32 %v804, 4294901760
    %806 = vmatpush1.xpose.msra.mxu0 %v805
    %807 = vmatprep.subr.mxu0 0.0
    %v808 = vand.u32 %v54, 4294901760
    %v809 = vsub.f32 %v54, %v808
    %v810 = vand.u32 %v809, 4294901760
    %811 = vmatpush1.xpose.msra.mxu0 %v810
    %812 = vmatprep.subr.mxu0 0.0
    %v813 = vand.u32 %v147, 4294901760
    %v814 = vsub.f32 %v147, %v813
    %v815 = vand.u32 %v814, 4294901760
    %816 = vmatpush2.xpose.msra.mxu0 %v815
    %817 = vmatprep.subr.mxu0 0.0
    %v818 = vand.u32 %v144, 4294901760
    %v819 = vsub.f32 %v144, %v818
    %v820 = vand.u32 %v819, 4294901760
    %821 = vmatpush2.xpose.msra.mxu0 %v820
    %822 = vmatprep.subr.mxu0 0.0
    %v823 = vand.u32 %v141, 4294901760
    %v824 = vsub.f32 %v141, %v823
    %v825 = vand.u32 %v824, 4294901760
    %826 = vmatpush2.xpose.msra.mxu0 %v825
    %827 = vmatprep.subr.mxu0 0.0
    %v828 = vand.u32 %v138, 4294901760
    %v829 = vsub.f32 %v138, %v828
    %v830 = vand.u32 %v829, 4294901760
    %831 = vmatpush2.xpose.msra.mxu0 %v830
    %832 = vmatprep.subr.mxu0 0.0
    %v833 = vand.u32 %v135, 4294901760
    %v834 = vsub.f32 %v135, %v833
    %v835 = vand.u32 %v834, 4294901760
    %836 = vmatpush2.xpose.msra.mxu0 %v835
    %837 = vmatprep.subr.mxu0 0.0
    %v838 = vand.u32 %v132, 4294901760
    %v839 = vsub.f32 %v132, %v838
    %v840 = vand.u32 %v839, 4294901760
    %841 = vmatpush2.xpose.msra.mxu0 %v840
    %842 = vmatprep.subr.mxu0 0.0
    %v843 = vand.u32 %v129, 4294901760
    %v844 = vsub.f32 %v129, %v843
    %v845 = vand.u32 %v844, 4294901760
    %846 = vmatpush2.xpose.msra.mxu0 %v845
    %847 = vmatprep.subr.mxu0 0.0
    %v848 = vand.u32 %v126, 4294901760
    %v849 = vsub.f32 %v126, %v848
    %v850 = vand.u32 %v849, 4294901760
    %851 = vmatpush2.xpose.msra.mxu0 %v850
    %852 = vmatprep.subr.mxu0 0.0
    %v853 = vand.u32 %v123, 4294901760
    %v854 = vsub.f32 %v123, %v853
    %v855 = vand.u32 %v854, 4294901760
    %856 = vmatpush2.xpose.msra.mxu0 %v855
    %857 = vmatprep.subr.mxu0 0.0
    %v858 = vand.u32 %v120, 4294901760
    %v859 = vsub.f32 %v120, %v858
    %v860 = vand.u32 %v859, 4294901760
    %861 = vmatpush2.xpose.msra.mxu0 %v860
    %862 = vmatprep.subr.mxu0 0.0
    %v863 = vand.u32 %v117, 4294901760
    %v864 = vsub.f32 %v117, %v863
    %v865 = vand.u32 %v864, 4294901760
    %866 = vmatpush2.xpose.msra.mxu0 %v865
    %867 = vmatprep.subr.mxu0 0.0
    %v868 = vand.u32 %v114, 4294901760
    %v869 = vsub.f32 %v114, %v868
    %v870 = vand.u32 %v869, 4294901760
    %871 = vmatpush2.xpose.msra.mxu0 %v870
    %872 = vmatprep.subr.mxu0 0.0
    %v873 = vand.u32 %v111, 4294901760
    %v874 = vsub.f32 %v111, %v873
    %v875 = vand.u32 %v874, 4294901760
    %876 = vmatpush2.xpose.msra.mxu0 %v875
    %877 = vmatprep.subr.mxu0 0.0
    %v878 = vand.u32 %v108, 4294901760
    %v879 = vsub.f32 %v108, %v878
    %v880 = vand.u32 %v879, 4294901760
    %881 = vmatpush2.xpose.msra.mxu0 %v880
    %882 = vmatprep.subr.mxu0 0.0
    %v883 = vand.u32 %v105, 4294901760
    %v884 = vsub.f32 %v105, %v883
    %v885 = vand.u32 %v884, 4294901760
    %886 = vmatpush2.xpose.msra.mxu0 %v885
    %887 = vmatprep.subr.mxu0 0.0
    %v888 = vand.u32 %v102, 4294901760
    %v889 = vsub.f32 %v102, %v888
    %v890 = vand.u32 %v889, 4294901760
    %891 = vmatpush2.xpose.msra.mxu0 %v890
    %892 = vmatprep.mubr.f32.mxu0 0.0
    %v893 = vand.u32 %v51, 4294901760
    %894 = vmatmul.mubr.f32.gmra.mxu0 %v893
    %v895 = vpop.f32.mrf.mxu0
    %v896 = vadd.f32 %v728, %v895
    %v897 = vpop.f32.mrf.mxu0
    %v898 = vadd.f32 %v730, %v897
    %899 = vdwg.mxu0
    %900 = vmatprep.subr.mxu0 0.0
    %v901 = vand.u32 %v99, 4294901760
    %902 = vmatpush1.xpose.msra.mxu0 %v901
    %903 = vmatprep.subr.mxu0 0.0
    %v904 = vand.u32 %v96, 4294901760
    %905 = vmatpush1.xpose.msra.mxu0 %v904
    %906 = vmatprep.subr.mxu0 0.0
    %v907 = vand.u32 %v93, 4294901760
    %908 = vmatpush1.xpose.msra.mxu0 %v907
    %909 = vmatprep.subr.mxu0 0.0
    %v910 = vand.u32 %v90, 4294901760
    %911 = vmatpush1.xpose.msra.mxu0 %v910
    %912 = vmatprep.subr.mxu0 0.0
    %v913 = vand.u32 %v87, 4294901760
    %914 = vmatpush1.xpose.msra.mxu0 %v913
    %915 = vmatprep.subr.mxu0 0.0
    %v916 = vand.u32 %v84, 4294901760
    %917 = vmatpush1.xpose.msra.mxu0 %v916
    %918 = vmatprep.subr.mxu0 0.0
    %v919 = vand.u32 %v81, 4294901760
    %920 = vmatpush1.xpose.msra.mxu0 %v919
    %921 = vmatprep.subr.mxu0 0.0
    %v922 = vand.u32 %v78, 4294901760
    %923 = vmatpush1.xpose.msra.mxu0 %v922
    %924 = vmatprep.subr.mxu0 0.0
    %v925 = vand.u32 %v75, 4294901760
    %926 = vmatpush1.xpose.msra.mxu0 %v925
    %927 = vmatprep.subr.mxu0 0.0
    %v928 = vand.u32 %v72, 4294901760
    %929 = vmatpush1.xpose.msra.mxu0 %v928
    %930 = vmatprep.subr.mxu0 0.0
    %v931 = vand.u32 %v69, 4294901760
    %932 = vmatpush1.xpose.msra.mxu0 %v931
    %933 = vmatprep.subr.mxu0 0.0
    %v934 = vand.u32 %v66, 4294901760
    %935 = vmatpush1.xpose.msra.mxu0 %v934
    %936 = vmatprep.subr.mxu0 0.0
    %v937 = vand.u32 %v63, 4294901760
    %938 = vmatpush1.xpose.msra.mxu0 %v937
    %939 = vmatprep.subr.mxu0 0.0
    %v940 = vand.u32 %v60, 4294901760
    %941 = vmatpush1.xpose.msra.mxu0 %v940
    %942 = vmatprep.subr.mxu0 0.0
    %v943 = vand.u32 %v57, 4294901760
    %944 = vmatpush1.xpose.msra.mxu0 %v943
    %945 = vmatprep.subr.mxu0 0.0
    %v946 = vand.u32 %v54, 4294901760
    %947 = vmatpush1.xpose.msra.mxu0 %v946
    %948 = vmatprep.subr.mxu0 0.0
    %v949 = vand.u32 %v147, 4294901760
    %950 = vmatpush2.xpose.msra.mxu0 %v949
    %951 = vmatprep.subr.mxu0 0.0
    %v952 = vand.u32 %v144, 4294901760
    %953 = vmatpush2.xpose.msra.mxu0 %v952
    %954 = vmatprep.subr.mxu0 0.0
    %v955 = vand.u32 %v141, 4294901760
    %956 = vmatpush2.xpose.msra.mxu0 %v955
    %957 = vmatprep.subr.mxu0 0.0
    %v958 = vand.u32 %v138, 4294901760
    %959 = vmatpush2.xpose.msra.mxu0 %v958
    %960 = vmatprep.subr.mxu0 0.0
    %v961 = vand.u32 %v135, 4294901760
    %962 = vmatpush2.xpose.msra.mxu0 %v961
    %963 = vmatprep.subr.mxu0 0.0
    %v964 = vand.u32 %v132, 4294901760
    %965 = vmatpush2.xpose.msra.mxu0 %v964
    %966 = vmatprep.subr.mxu0 0.0
    %v967 = vand.u32 %v129, 4294901760
    %968 = vmatpush2.xpose.msra.mxu0 %v967
    %969 = vmatprep.subr.mxu0 0.0
    %v970 = vand.u32 %v126, 4294901760
    %971 = vmatpush2.xpose.msra.mxu0 %v970
    %972 = vmatprep.subr.mxu0 0.0
    %v973 = vand.u32 %v123, 4294901760
    %974 = vmatpush2.xpose.msra.mxu0 %v973
    %975 = vmatprep.subr.mxu0 0.0
    %v976 = vand.u32 %v120, 4294901760
    %977 = vmatpush2.xpose.msra.mxu0 %v976
    %978 = vmatprep.subr.mxu0 0.0
    %v979 = vand.u32 %v117, 4294901760
    %980 = vmatpush2.xpose.msra.mxu0 %v979
    %981 = vmatprep.subr.mxu0 0.0
    %v982 = vand.u32 %v114, 4294901760
    %983 = vmatpush2.xpose.msra.mxu0 %v982
    %984 = vmatprep.subr.mxu0 0.0
    %v985 = vand.u32 %v111, 4294901760
    %986 = vmatpush2.xpose.msra.mxu0 %v985
    %987 = vmatprep.subr.mxu0 0.0
    %v988 = vand.u32 %v108, 4294901760
    %989 = vmatpush2.xpose.msra.mxu0 %v988
    %990 = vmatprep.subr.mxu0 0.0
    %v991 = vand.u32 %v105, 4294901760
    %992 = vmatpush2.xpose.msra.mxu0 %v991
    %993 = vmatprep.subr.mxu0 0.0
    %v994 = vand.u32 %v102, 4294901760
    %995 = vmatpush2.xpose.msra.mxu0 %v994
    %996 = vmatprep.mubr.f32.mxu0 0.0
    %v997 = vand.u32 %v51, 4294901760
    %998 = vmatmul.mubr.f32.gmra.mxu0 %v997
    %v999 = vpop.f32.mrf.mxu0
    %v1000 = vadd.f32 %v896, %v999
    %v1001 = vpop.f32.mrf.mxu0
    %v1002 = vadd.f32 %v898, %v1001
    %1003 = vdwg.mxu0
    %s1004 = sld [smem:[#allocation2]]
    %v1005 = vstv %s1004
    %v1006 = vadd.f32 %v1000, %v1005
    %v1007 = vadd.f32 %v1002, %v1005
    %v1008 = vmax.f32 %v1006, -0.25
    %v1009 = vmax.f32 %v1007, -0.25
    %v1010 = vmin.f32 %v1008, 0.25
    %v1011 = vmin.f32 %v1009, 0.25
    %v1014 = vcombine.low %v1010, %v1011
    %v1016 = vunpack.c.l.s4 1966171168
    %v1017 = vunpack.c.0.s8 %v1016
    %v1018 = vlaneseq
    %v1019 = vshrl.u32 %v1018, 7
    %v1020 = vsub.s32 %v1017, %v1019
    %v1021 = vrot.slane %v1014, %v1020
    %v1023 = vunpack.c.l.s4 1966171168
    %v1024 = vunpack.c.0.s8 %v1023
    %v1025 = vlaneseq
    %v1026 = vshrl.u32 %v1025, 7
    %v1027 = vsub.s32 %v1024, %v1026
    %v1028 = vrot.slane %v1021, %v1027
    %v1030 = vlaneseq
    %vm1031 = vcmp.ge.s32.totalorder %v1030, 0
    %vm1032 = vcmp.lt.s32.totalorder %v1030, 256
    %vm1033 = vmand %vm1031, %vm1032
    %1034 = vst.msk [vmem:[#allocation3] sm:$0x3] %vm1033, %v1028
    // Predicated region
    $region14: #{tpu_custom_call.1} parent=1 // pred_check
      _
    $region15: #{tpu_custom_call.1} parent=1 // pred_check_branch
      %1036 = sbr.rel (0) target = $region17
    $region16: #{tpu_custom_call.1} parent=1 // pred_region
      %s1038 = ssub.s32 32, 32
      %1039 = vsyncadd [#allocation4], %s1038
      %s1041 = sshll.u32 [#allocation3], 4
      %s1042 = int_to_ptr.vmem [resolvable:$true] %s1041
      %1044 = dma.vmem_to_hbm [thread:$0]  %s1042, 32, %s3, [#allocation4]
    $region17: #{tpu_custom_call.1} parent=1 // pred_fallthru
      _
    // Predicated region
    $region18: #{tpu_custom_call.1} parent=1 // pred_check
      _
    $region19: #{tpu_custom_call.1} parent=1 // pred_check_branch
      %1046 = sbr.rel (0) target = $region21
    $region20: #{tpu_custom_call.1} parent=1 // pred_region
      %1047 = dma.done [#allocation4], 32
    $region21: #{tpu_custom_call.1} parent=1 // pred_fallthru
      _
    %1048 = vsyncpa [#allocation4], 1

</llo_original>
